<compile_context>
chip_gen: v6e
topology: v6e:2x2x1
jax: 0.10.0
libtpu: 0.0.40
codegen_flags: <defaults>
</compile_context>

<pallas_src>
import functools

import jax
import jax.numpy as jnp
from jax.experimental import pallas as pl
from jax.experimental.pallas import tpu as pltpu


# --------------------------------------------------------------------------- #
# Kernels
# --------------------------------------------------------------------------- #
def _resident_kernel(x_ref,    # (TB, D_in)   bf16
                     w1_ref,   # (D_in, MHp)  bf16  (resident: constant index_map)
                     b1_ref,   # (1, MHp)     f32
                     w2_ref,   # (MHp, Dp)    bf16  (scale folded in, resident)
                     b2_ref,   # (1, Dp)      f32
                     o_ref,    # (TB, Dp)     f32
                     *, bf16_act):
    h = jnp.dot(x_ref[...], w1_ref[...], preferred_element_type=jnp.float32)
    h = h + b1_ref[...]
    if bf16_act:                      # bf16 EUP tanh (v6e/v7x): ~2x tanh throughput
        h = jnp.tanh(h.astype(jnp.bfloat16))
    else:                             # f32 tanh path (v5e and older)
        h = jnp.tanh(h).astype(jnp.bfloat16)
    o_ref[...] = (jnp.dot(h, w2_ref[...], preferred_element_type=jnp.float32)
                  + b2_ref[...])


def _stream_kernel(x_ref,     # (TB, D_in)   bf16
                   w1_ref,    # (D_in, TMH)  bf16
                   b1_ref,    # (1, TMH)     f32
                   w2_ref,    # (TMH, Dp)    bf16
                   b2_ref,    # (1, Dp)      f32
                   o_ref,     # (TB, Dp)     f32  (resident across the reduction axis)
                   *, bf16_act):
    k = pl.program_id(1)              # MH reduction-tile index (last grid axis)

    h = jnp.dot(x_ref[...], w1_ref[...], preferred_element_type=jnp.float32)
    h = h + b1_ref[...]
    if bf16_act:
        h = jnp.tanh(h.astype(jnp.bfloat16))
    else:
        h = jnp.tanh(h).astype(jnp.bfloat16)
    y = jnp.dot(h, w2_ref[...], preferred_element_type=jnp.float32)

    @pl.when(k == 0)
    def _init():
        o_ref[...] = y + b2_ref[...]

    @pl.when(k > 0)
    def _accumulate():
        o_ref[...] = o_ref[...] + y


# --------------------------------------------------------------------------- #
# Planning helpers
# --------------------------------------------------------------------------- #
def _round_up(x, m):
    return ((x + m - 1) // m) * m


def _vmem_capacity_bytes():
    """Per-core VMEM capacity; conservative 64 MiB (v7x) fallback if query fails."""
    try:
        cap = int(pltpu.get_tpu_info().vmem_capacity_bytes)
        if cap > 0:
            return cap
    except Exception:
        pass
    return 64 * 1024 * 1024


def _bf16_activation_ok():
    """bf16 tanh only where the VPU/EUP has a bf16 path (v6e / v7x)."""
    try:
        kind = jax.devices()[0].device_kind.lower()
    except Exception:
        return True
    return not any(t in kind for t in ("v2", "v3", "v4", "v5"))


def _choose_tb(B, tb_pref, *, prefer_split):
    """Batch tile: multiple of 16; with prefer_split, aim for >=2 grid steps
    (v7x megacore) instead of one giant tile."""
    Bp16 = _round_up(max(B, 1), 16)
    tb = min(tb_pref, Bp16)
    if prefer_split and tb == Bp16 and Bp16 >= 32:
        tb = max(16, (Bp16 // 2 // 16) * 16)
    return max(16, tb)


# --------------------------------------------------------------------------- #
# Prepare (cacheable weight repack + plan) and apply
# --------------------------------------------------------------------------- #
def cn2l2_prepare(W1, b1, W2, b2, alpha, bound, *,
                  batch_tile=256, mh_tile=2048, force_path=None):
    """Repacks/pads the weights once (cache this for inference) and builds the
    tiling plan from a generation-aware VMEM budget."""
    M, D_in, H = W1.shape
    D_out = W2.shape[-1]
    MH = M * H
    Dp = _round_up(D_out, 128)                       # lane-dense output columns

    cap = _vmem_capacity_bytes()
    budget = cap - cap // 8                          # ~12% headroom below physical
    tb_pref = max(16, (int(batch_tile) // 16) * 16)

    # ---- resident-vs-stream decision (sized with the *preferred* batch tile) ----
    MHp_res = _round_up(MH, 128)
    need_res = (2 * tb_pref * D_in * 2               # x tile, double-buffered, bf16
                + 2 * D_in * MHp_res * 2             # W1_cat (bf16)
                + 2 * MHp_res * 4                    # b1
                + 2 * MHp_res * Dp * 2               # W2_s (bf16)
                + 2 * Dp * 4                         # b2
                + 2 * tb_pref * Dp * 4               # output tile (f32)
                + tb_pref * MHp_res * 6)             # h intermediate (f32 + bf16 copy)
    path = "resident" if need_res <= budget else "stream"
    if force_path is not None:
        path = force_path

    if path == "resident":
        MHp = MHp_res
        tmh = MHp
        vmem_need = need_res
    else:
        # Largest MH tile (multiple of 128) that fits the budget with this tb_pref.
        fixed = 2 * tb_pref * D_in * 2 + 2 * Dp * 4 + 2 * tb_pref * Dp * 4
        per_tmh = 4 * D_in + 8 + 4 * Dp + 6 * tb_pref
        tmh_budget = ((int(budget * 0.8) - fixed) // per_tmh // 128) * 128
        tmh = max(128, min(max(tmh_budget, 128),
                           max(128, (int(mh_tile) // 128) * 128),
                           _round_up(MH, 128)))
        MHp = _round_up(MH, tmh)
        vmem_need = fixed + per_tmh * tmh

    vmem_limit = int(min(budget, max(vmem_need + (16 << 20), 32 << 20)))

    # ---- weight repack (module-major ordering m*H + h, consistent everywhere) ----
    a = jnp.abs(alpha).reshape(M)
    cw = (1.0 + a) / (1.0 + jnp.sum(a))
    scale = (cw * bound / M).astype(jnp.float32)                       # (M,)

    W1_cat = jnp.transpose(W1, (1, 0, 2)).reshape(D_in, MH)
    b1_cat = b1.reshape(1, MH)
    W2_s = (W2 * scale[:, None, None]).reshape(MH, D_out)
    b2_sum = jnp.sum(b2.reshape(M, D_out) * scale[:, None], axis=0, keepdims=True)

    # Zero-pad hidden (MH -> MHp) and output (D_out -> Dp): padded hidden units
    # see zero W1 columns / zero b1 -> tanh(0)=0, and zero W2 rows -> contribute 0.
    W1_cat = jnp.pad(W1_cat, ((0, 0), (0, MHp - MH))).astype(jnp.bfloat16)
    b1_cat = jnp.pad(b1_cat, ((0, 0), (0, MHp - MH))).astype(jnp.float32)
    W2_s = jnp.pad(W2_s, ((0, MHp - MH), (0, Dp - D_out))).astype(jnp.bfloat16)
    b2_sum = jnp.pad(b2_sum, ((0, 0), (0, Dp - D_out))).astype(jnp.float32)

    return dict(W1_cat=W1_cat, b1_cat=b1_cat, W2_s=W2_s, b2_sum=b2_sum,
                d_in=D_in, d_out=D_out, mh_padded=MHp, d_out_padded=Dp,
                path=path, tmh=tmh, tb_pref=tb_pref,
                vmem_limit=vmem_limit, bf16_act=_bf16_activation_ok())


def cn2l2_apply(prepared, x):
    """Runs the fused kernel on x (any (B, ...) shape flattening to d_in)."""
    W1_cat, b1_cat = prepared["W1_cat"], prepared["b1_cat"]
    W2_s, b2_sum = prepared["W2_s"], prepared["b2_sum"]
    D_in, D_out = prepared["d_in"], prepared["d_out"]
    MHp, Dp = prepared["mh_padded"], prepared["d_out_padded"]
    path, tmh = prepared["path"], prepared["tmh"]
    tb_pref, vmem_limit = prepared["tb_pref"], prepared["vmem_limit"]
    bf16_act = prepared["bf16_act"]

    B = x.shape[0]
    xf = x.reshape(B, -1)
    assert xf.shape[1] == D_in, "input feature size does not match W1"

    # Batch tiling: pad B to a multiple of a 16-aligned tile (never fall back to
    # an arbitrary full-extent tile).  In the resident path prefer >=2 tiles so
    # both v7x TensorCores are used; in the stream path prefer the largest tile
    # to minimize weight re-streaming.
    tb = _choose_tb(B, tb_pref, prefer_split=(path == "resident"))
    Bp = _round_up(B, tb)
    xp = xf
    if Bp != B:
        xp = jnp.pad(xf, ((0, Bp - B), (0, 0)))
    xp = xp.astype(jnp.bfloat16)

    if path == "resident":
        grid = (Bp // tb,)
        grid_spec = pltpu.PrefetchScalarGridSpec(
            num_scalar_prefetch=0,
            grid=grid,
            in_specs=[
                pl.BlockSpec((tb, D_in), lambda i: (i, 0)),
                pl.BlockSpec((D_in, MHp), lambda i: (0, 0)),   # constant -> resident
                pl.BlockSpec((1, MHp), lambda i: (0, 0)),
                pl.BlockSpec((MHp, Dp), lambda i: (0, 0)),     # constant -> resident
                pl.BlockSpec((1, Dp), lambda i: (0, 0)),
            ],
            out_specs=pl.BlockSpec((tb, Dp), lambda i: (i, 0)),
        )
        kernel = functools.partial(_resident_kernel, bf16_act=bf16_act)
        dim_sem = ("parallel",)
    else:
        grid = (Bp // tb, MHp // tmh)
        grid_spec = pltpu.PrefetchScalarGridSpec(
            num_scalar_prefetch=0,
            grid=grid,
            in_specs=[
                pl.BlockSpec((tb, D_in), lambda i, k: (i, 0)),
                pl.BlockSpec((D_in, tmh), lambda i, k: (0, k)),
                pl.BlockSpec((1, tmh), lambda i, k: (0, k)),
                pl.BlockSpec((tmh, Dp), lambda i, k: (k, 0)),
                pl.BlockSpec((1, Dp), lambda i, k: (0, 0)),
            ],
            out_specs=pl.BlockSpec((tb, Dp), lambda i, k: (i, 0)),
        )
        kernel = functools.partial(_stream_kernel, bf16_act=bf16_act)
        dim_sem = ("parallel", "arbitrary")

    out_padded = pl.pallas_call(
        kernel,
        out_shape=jax.ShapeDtypeStruct((Bp, Dp), jnp.float32),
        grid_spec=grid_spec,
        compiler_params=pltpu.CompilerParams(
            dimension_semantics=dim_sem,
            vmem_limit_bytes=vmem_limit),
    )(xp, W1_cat, b1_cat, W2_s, b2_sum)

    return out_padded[:B, :D_out]


def cn2l2_forward(x, W1, b1, W2, b2, alpha, bound, **kwargs):
    """Convenience one-shot forward (prepare + apply).  For inference, call
    cn2l2_prepare once and reuse the result across batches."""
    return cn2l2_apply(cn2l2_prepare(W1, b1, W2, b2, alpha, bound, **kwargs), x)


# --------------------------------------------------------------------------- #
# Pure-JAX reference (mirrors the PyTorch forward exactly, f32)
# --------------------------------------------------------------------------- #
def cn2l2_reference(x, W1, b1, W2, b2, alpha, bound):
    a = jnp.abs(alpha)                               # (M,1,1)
    cw = (1.0 + a) / (1.0 + jnp.sum(a))
    B = x.shape[0]
    xf = x.reshape(B, -1)
    h = jnp.tanh(jnp.einsum('bd,mdh->mbh', xf, W1) + b1)
    y = jnp.einsum('mbh,mho->mbo', h, W2) + b2
    y = y * cw * bound / W1.shape[0]
    return jnp.sum(y, axis=0)


# --------------------------------------------------------------------------- #
# Self-test
# --------------------------------------------------------------------------- #
if __name__ == "__main__":
    key = jax.random.PRNGKey(0)
    bound = 2.0

    # ---------- Test 1: module's toy shapes (resident path) -------------------
    B, C, Hh, Ww = 8, 4, 4, 4
    dim_in = C * Hh * Ww            # 64
    module_size = 32
    dim_out = 16
    n_modules = 3

    k_x, k_w1, k_b1, k_w2, k_b2, k2 = jax.random.split(key, 6)
    x = jax.random.normal(k_x, (B, C, Hh, Ww), dtype=jnp.float32)

    stdv1 = 1.0 / dim_in ** 0.5
    W1 = jax.random.uniform(k_w1, (n_modules, dim_in, module_size),
                            minval=-stdv1, maxval=stdv1, dtype=jnp.float32)
    b1 = jax.random.uniform(k_b1, (n_modules, 1, module_size),
                            minval=-stdv1, maxval=stdv1, dtype=jnp.float32)
    stdv2 = 1.0 / module_size ** 0.5
    W2 = jax.random.uniform(k_w2, (n_modules, module_size, dim_out),
                            minval=-stdv2, maxval=stdv2, dtype=jnp.float32)
    b2 = jax.random.uniform(k_b2, (n_modules, 1, dim_out),
                            minval=-stdv2, maxval=stdv2, dtype=jnp.float32)
    alpha = 0.2 * jnp.ones((n_modules, 1, 1), dtype=jnp.float32)

    prepared = cn2l2_prepare(W1, b1, W2, b2, alpha, bound)   # cacheable repack
    out = jax.block_until_ready(cn2l2_apply(prepared, x))
    ref = cn2l2_reference(x, W1, b1, W2, b2, alpha, bound)
    assert out.shape == (B, dim_out)
    assert jnp.allclose(out, ref, atol=3e-2, rtol=3e-2), "mismatch (resident path)"

    # ---------- Test 2: force the streaming (reduction-grid) path -------------
    B2, dim_in2, module_size2, dim_out2, n_modules2 = 32, 64, 160, 16, 2
    k_x2, k_w12, k_b12, k_w22, k_b22 = jax.random.split(k2, 5)
    x2 = jax.random.normal(k_x2, (B2, dim_in2), dtype=jnp.float32)
    s1 = 1.0 / dim_in2 ** 0.5
    W1b = jax.random.uniform(k_w12, (n_modules2, dim_in2, module_size2),
                             minval=-s1, maxval=s1, dtype=jnp.float32)
    b1b = jax.random.uniform(k_b12, (n_modules2, 1, module_size2),
                             minval=-s1, maxval=s1, dtype=jnp.float32)
    s2 = 1.0 / module_size2 ** 0.5
    W2b = jax.random.uniform(k_w22, (n_modules2, module_size2, dim_out2),
                             minval=-s2, maxval=s2, dtype=jnp.float32)
    b2b = jax.random.uniform(k_b22, (n_modules2, 1, dim_out2),
                             minval=-s2, maxval=s2, dtype=jnp.float32)
    alphab = 0.2 * jnp.ones((n_modules2, 1, 1), dtype=jnp.float32)

    prep2 = cn2l2_prepare(W1b, b1b, W2b, b2b, alphab, bound,
                          mh_tile=128, force_path="stream")
    out2 = jax.block_until_ready(cn2l2_apply(prep2, x2))
    ref2 = cn2l2_reference(x2, W1b, b1b, W2b, b2b, alphab, bound)
    assert out2.shape == (B2, dim_out2)
    assert jnp.allclose(out2, ref2, atol=5e-2, rtol=5e-2), "mismatch (stream path)"

    print("KERNEL_OK")
</pallas_src>

<mosaic_0001>
module attributes {stable_mosaic.version = 11 : i64} {
  func.func @_resident_kernel(%arg0: i32, %arg1: memref<16x64xbf16, #tpu.memory_space<vmem>>, %arg2: memref<64x128xbf16, #tpu.memory_space<vmem>>, %arg3: memref<1x128xf32, #tpu.memory_space<vmem>>, %arg4: memref<128x128xbf16, #tpu.memory_space<vmem>>, %arg5: memref<1x128xf32, #tpu.memory_space<vmem>>, %arg6: memref<16x128xf32, #tpu.memory_space<vmem>>) attributes {dimension_semantics = [#tpu.dimension_semantics<parallel>], iteration_bounds = array<i64: 1>, scalar_prefetch = 0 : i64, scratch_operands = 0 : i64, tpu.core_type = #tpu.core_type<tc>, window_params = [{transform_indices = @transform_0, window_bounds = array<i64: 16, 64>}, {pipeline_mode = #tpu.pipeline_mode<synchronous>, transform_indices = @transform_1, window_bounds = array<i64: 64, 128>}, {pipeline_mode = #tpu.pipeline_mode<synchronous>, transform_indices = @transform_2, window_bounds = array<i64: 1, 128>}, {pipeline_mode = #tpu.pipeline_mode<synchronous>, transform_indices = @transform_3, window_bounds = array<i64: 128, 128>}, {pipeline_mode = #tpu.pipeline_mode<synchronous>, transform_indices = @transform_4, window_bounds = array<i64: 1, 128>}, {transform_indices = @transform_5, window_bounds = array<i64: 16, 128>}]} {
    %c0 = arith.constant 0 : index
    %c0_0 = arith.constant 0 : index
    %0 = vector.load %arg1[%c0, %c0_0] : memref<16x64xbf16, #tpu.memory_space<vmem>>, vector<16x64xbf16>
    %c0_1 = arith.constant 0 : index
    %c0_2 = arith.constant 0 : index
    %1 = vector.load %arg2[%c0_1, %c0_2] : memref<64x128xbf16, #tpu.memory_space<vmem>>, vector<64x128xbf16>
    %cst = arith.constant dense<0.000000e+00> : vector<16x128xf32>
    %2 = tpu.matmul %0, %1, %cst {dimension_numbers = #tpu.dot_dimension_numbers<[1], [0], [0], [1], [0, 0, 1, 1], [], []>} : vector<16x64xbf16>, vector<64x128xbf16>, vector<16x128xf32> -> vector<16x128xf32>
    %c0_3 = arith.constant 0 : index
    %c0_4 = arith.constant 0 : index
    %3 = vector.load %arg3[%c0_3, %c0_4] : memref<1x128xf32, #tpu.memory_space<vmem>>, vector<1x128xf32>
    %4 = vector.broadcast %3 : vector<1x128xf32> to vector<16x128xf32>
    %5 = arith.addf %2, %4 : vector<16x128xf32>
    %6 = arith.truncf %5 : vector<16x128xf32> to vector<16x128xbf16>
    %7 = math.tanh %6 : vector<16x128xbf16>
    %c0_5 = arith.constant 0 : index
    %c0_6 = arith.constant 0 : index
    %8 = vector.load %arg4[%c0_5, %c0_6] : memref<128x128xbf16, #tpu.memory_space<vmem>>, vector<128x128xbf16>
    %cst_7 = arith.constant dense<0.000000e+00> : vector<16x128xf32>
    %9 = tpu.matmul %7, %8, %cst_7 {dimension_numbers = #tpu.dot_dimension_numbers<[1], [0], [0], [1], [0, 0, 1, 1], [], []>} : vector<16x128xbf16>, vector<128x128xbf16>, vector<16x128xf32> -> vector<16x128xf32>
    %c0_8 = arith.constant 0 : index
    %c0_9 = arith.constant 0 : index
    %10 = vector.load %arg5[%c0_8, %c0_9] : memref<1x128xf32, #tpu.memory_space<vmem>>, vector<1x128xf32>
    %11 = vector.broadcast %10 : vector<1x128xf32> to vector<16x128xf32>
    %12 = arith.addf %9, %11 : vector<16x128xf32>
    %c0_10 = arith.constant 0 : index
    %c0_11 = arith.constant 0 : index
    %13 = vector.load %arg6[%c0_10, %c0_11] : memref<16x128xf32, #tpu.memory_space<vmem>>, vector<16x128xf32>
    tpu.vector_store %arg6[%c0_10, %c0_11], %12 {strides = array<i32>} : memref<16x128xf32, #tpu.memory_space<vmem>>, vector<16x128xf32>,
    return
  }
  func.func @transform_0(%arg0: i32) -> (i32, i32) {
    %c0_i32 = arith.constant 0 : i32
    %c0_i32_0 = arith.constant 0 : i32
    return %arg0, %c0_i32 : i32, i32
  }
  func.func @transform_1(%arg0: i32) -> (i32, i32) {
    %c0_i32 = arith.constant 0 : i32
    %c0_i32_0 = arith.constant 0 : i32
    %c0_i32_1 = arith.constant 0 : i32
    return %c0_i32, %c0_i32_0 : i32, i32
  }
  func.func @transform_2(%arg0: i32) -> (i32, i32) {
    %c0_i32 = arith.constant 0 : i32
    %c0_i32_0 = arith.constant 0 : i32
    %c0_i32_1 = arith.constant 0 : i32
    return %c0_i32, %c0_i32_0 : i32, i32
  }
  func.func @transform_3(%arg0: i32) -> (i32, i32) {
    %c0_i32 = arith.constant 0 : i32
    %c0_i32_0 = arith.constant 0 : i32
    %c0_i32_1 = arith.constant 0 : i32
    return %c0_i32, %c0_i32_0 : i32, i32
  }
  func.func @transform_4(%arg0: i32) -> (i32, i32) {
    %c0_i32 = arith.constant 0 : i32
    %c0_i32_0 = arith.constant 0 : i32
    %c0_i32_1 = arith.constant 0 : i32
    return %c0_i32, %c0_i32_0 : i32, i32
  }
  func.func @transform_5(%arg0: i32) -> (i32, i32) {
    %c0_i32 = arith.constant 0 : i32
    %c0_i32_0 = arith.constant 0 : i32
    return %arg0, %c0_i32 : i32, i32
  }
}

</mosaic_0001>

<llo_original>
// kernel: tpu_custom_call.1
$region0: #{tpu_custom_call.1}
  #allocation0 [shape = 'u32[]', space=smem, size = 0x4, offset = 0x4, fixed_abs, tag = 'smem constant byte address 0x4 - core index']
  #allocation1 [shape = 'u32[144,128]{1,0:T(1,128)}', space=vmem, size = 0x12000, scoped, tag = 'internal scratch']
  %s0 = inlined_call_operand.hbm [shape: bf16[16,64], index: 0, kind: input, shape index: {}]
  %s1 = inlined_call_operand.hbm [shape: bf16[64,128], index: 1, kind: input, shape index: {}]
  %s2 = inlined_call_operand.vmem [shape: f32[1,128], index: 2, kind: input, shape index: {}]
  %s3 = inlined_call_operand.hbm [shape: bf16[128,128], index: 3, kind: input, shape index: {}]
  %s4 = inlined_call_operand.vmem [shape: f32[1,128], index: 4, kind: input, shape index: {}]
  %s5 = inlined_call_operand.hbm [shape: f32[16,128], index: 5, kind: output, shape index: {}]
  %s6 = sld [smem:[#allocation0]]
  $region42: #{tpu_custom_call.1} parent=0
    _
  %s8 = ssub.s32 1, %s6
  %s9 = scalar_select 0, %s8, %s6
  $region1: #{tpu_custom_call.1} parent=0
    #allocation2 [shape = 'u8[4096]{0}', space=vmem, size = 0x1000, scoped, tag = 'input window, operand 0, single buffered']
    #allocation3 [shape = 's32[1]{0}', space=sflag, size = 0x4, scoped, tag = 'scoped memory for tpu_custom_call.1']
    #allocation4 [shape = 's32[1]{0}', space=sflag, size = 0x4, scoped, tag = 'scoped memory for tpu_custom_call.1']
    #allocation5 [shape = 'u8[16384]{0}', space=vmem, size = 0x4000, scoped, tag = 'input window, operand 1, single buffered']
    #allocation6 [shape = 's32[1]{0}', space=sflag, size = 0x4, scoped, tag = 'scoped memory for tpu_custom_call.1']
    #allocation7 [shape = 'u8[32768]{0}', space=vmem, size = 0x8000, scoped, tag = 'input window, operand 3, single buffered']
    #allocation8 [shape = 'u8[8192]{0}', space=vmem, size = 0x2000, scoped, tag = 'output window, operand 0, single buffered']
    %10 = vsyncpa [#allocation3], 0
    %11 = vsyncpa [#allocation6], 0
    %12 = vsyncpa [#allocation4], 0
    // Predicated region
    $region2: #{tpu_custom_call.1} parent=1 // pred_check
      _
    $region3: #{tpu_custom_call.1} parent=1 // pred_check_branch
      %14 = sbr.rel (0) target = $region5
    $region4: #{tpu_custom_call.1} parent=1 // pred_region
      %s16 = ssub.s32 128, 128
      %17 = vsyncadd [#allocation3], %s16
      %s18 = sshll.u32 [#allocation2], 4
      %s19 = int_to_ptr.vmem [resolvable:$true] %s18
      %24 = dma.hbm_to_vmem [thread:$0]  %s0, 128, %s19, [#allocation3], 64, 64, 4
    $region5: #{tpu_custom_call.1} parent=1 // pred_fallthru
      _
    // Predicated region
    $region6: #{tpu_custom_call.1} parent=1 // pred_check
      _
    $region7: #{tpu_custom_call.1} parent=1 // pred_check_branch
      %26 = sbr.rel (0) target = $region9
    $region8: #{tpu_custom_call.1} parent=1 // pred_region
      %s28 = ssub.s32 512, 512
      %29 = vsyncadd [#allocation6], %s28
      %s30 = sshll.u32 [#allocation5], 4
      %s31 = int_to_ptr.vmem [resolvable:$true] %s30
      %36 = dma.hbm_to_vmem [thread:$0]  %s1, 512, %s31, [#allocation6], 64, 64, 4
    $region9: #{tpu_custom_call.1} parent=1 // pred_fallthru
      _
    // Predicated region
    $region10: #{tpu_custom_call.1} parent=1 // pred_check
      _
    $region11: #{tpu_custom_call.1} parent=1 // pred_check_branch
      %38 = sbr.rel (0) target = $region13
    $region12: #{tpu_custom_call.1} parent=1 // pred_region
      _
    $region13: #{tpu_custom_call.1} parent=1 // pred_fallthru
      _
    // Predicated region
    $region14: #{tpu_custom_call.1} parent=1 // pred_check
      _
    $region15: #{tpu_custom_call.1} parent=1 // pred_check_branch
      %40 = sbr.rel (0) target = $region17
    $region16: #{tpu_custom_call.1} parent=1 // pred_region
      %s42 = ssub.s32 1024, 1024
      %43 = vsyncadd [#allocation6], %s42
      %s44 = sshll.u32 [#allocation7], 4
      %s45 = int_to_ptr.vmem [resolvable:$true] %s44
      %50 = dma.hbm_to_vmem [thread:$0]  %s3, 1024, %s45, [#allocation6], 64, 64, 4
    $region17: #{tpu_custom_call.1} parent=1 // pred_fallthru
      _
    // Predicated region
    $region18: #{tpu_custom_call.1} parent=1 // pred_check
      _
    $region19: #{tpu_custom_call.1} parent=1 // pred_check_branch
      %52 = sbr.rel (0) target = $region21
    $region20: #{tpu_custom_call.1} parent=1 // pred_region
      _
    $region21: #{tpu_custom_call.1} parent=1 // pred_fallthru
      _
    // Predicated region
    $region22: #{tpu_custom_call.1} parent=1 // pred_check
      _
    $region23: #{tpu_custom_call.1} parent=1 // pred_check_branch
      %54 = sbr.rel (0) target = $region25
    $region24: #{tpu_custom_call.1} parent=1 // pred_region
      %55 = dma.done [#allocation3], 128
    $region25: #{tpu_custom_call.1} parent=1 // pred_fallthru
      _
    // Predicated region
    $region26: #{tpu_custom_call.1} parent=1 // pred_check
      _
    $region27: #{tpu_custom_call.1} parent=1 // pred_check_branch
      %57 = sbr.rel (0) target = $region29
    $region28: #{tpu_custom_call.1} parent=1 // pred_region
      %58 = dma.done [#allocation6], 512
    $region29: #{tpu_custom_call.1} parent=1 // pred_fallthru
      _
    // Predicated region
    $region30: #{tpu_custom_call.1} parent=1 // pred_check
      _
    $region31: #{tpu_custom_call.1} parent=1 // pred_check_branch
      %60 = sbr.rel (0) target = $region33
    $region32: #{tpu_custom_call.1} parent=1 // pred_region
      %61 = dma.done [#allocation6], 1024
    $region33: #{tpu_custom_call.1} parent=1 // pred_fallthru
      _
    %v63 = vld [vmem:[#allocation2] sm:$0xf]
    %v64 = vld [vmem:[#allocation2 + $0x4] sm:$0xf]
    %v65 = vld [vmem:[#allocation5] sm:$0xf]
    %v66 = vld [vmem:[#allocation5 + $0x4] sm:$0xf]
    %v67 = vld [vmem:[#allocation5 + $0x8] sm:$0xf]
    %v68 = vld [vmem:[#allocation5 + $0xc] sm:$0xf]
    %v69 = vld [vmem:[#allocation5 + $0x10] sm:$0xf]
    %v70 = vld [vmem:[#allocation5 + $0x14] sm:$0xf]
    %v71 = vld [vmem:[#allocation5 + $0x18] sm:$0xf]
    %v72 = vld [vmem:[#allocation5 + $0x1c] sm:$0xf]
    %v73 = vld [vmem:[%s2] sm:$0x1]
    %v75 = vlaneseq
    %v76 = vshrl.u32 %v75, 7
    %v77 = vsub.s32 0, %v76
    %v78 = vrot.slane %v73, %v77
    %v82 = vunpack.c.l.b16 %v63
    %v83 = vunpack.c.l.b16 %v64
    %v84 = vpack.c.b16 %v83, %v82
    %v93 = vunpack.c.l.b16 %v65
    %v94 = vunpack.c.l.b16 %v66
    %v95 = vunpack.c.l.b16 %v67
    %v96 = vunpack.c.l.b16 %v68
    %v97 = vunpack.c.l.b16 %v69
    %v98 = vunpack.c.l.b16 %v70
    %v99 = vunpack.c.l.b16 %v71
    %v100 = vunpack.c.l.b16 %v72
    %v101 = vpack.c.b16 %v94, %v93
    %v102 = vpack.c.b16 %v96, %v95
    %v103 = vpack.c.b16 %v98, %v97
    %v104 = vpack.c.b16 %v100, %v99
    %vm109 = vcmask 523264
    %v111 = vsel %vm109, %v84, 0
    %113 = vmatprep.subr.bf16.mxu0 0
    %114 = vmatpush1.bf16.msra.mxu0 0
    %115 = vmatprep.subr.bf16.mxu0 0
    %116 = vmatpush1.bf16.msra.mxu0 0
    %117 = vmatprep.subr.bf16.mxu0 0
    %118 = vmatpush1.bf16.msra.mxu0 0
    %119 = vmatprep.subr.bf16.mxu0 0
    %120 = vmatpush1.bf16.msra.mxu0 0
    %121 = vmatprep.subr.bf16.mxu0 0
    %122 = vmatpush1.bf16.msra.mxu0 %v104
    %123 = vmatprep.subr.bf16.mxu0 0
    %124 = vmatpush1.bf16.msra.mxu0 %v103
    %125 = vmatprep.subr.bf16.mxu0 0
    %126 = vmatpush1.bf16.msra.mxu0 %v102
    %127 = vmatprep.subr.bf16.mxu0 0
    %128 = vmatpush1.bf16.msra.mxu0 %v101
    %129 = vmatprep.subr.bf16.mxu0 0
    %130 = vmatpush2.bf16.msra.mxu0 0
    %131 = vmatprep.subr.bf16.mxu0 0
    %132 = vmatpush2.bf16.msra.mxu0 0
    %133 = vmatprep.subr.bf16.mxu0 0
    %134 = vmatpush2.bf16.msra.mxu0 0
    %135 = vmatprep.subr.bf16.mxu0 0
    %136 = vmatpush2.bf16.msra.mxu0 0
    %137 = vmatprep.subr.bf16.mxu0 0
    %138 = vmatpush2.bf16.msra.mxu0 0
    %139 = vmatprep.subr.bf16.mxu0 0
    %140 = vmatpush2.bf16.msra.mxu0 0
    %141 = vmatprep.subr.bf16.mxu0 0
    %142 = vmatpush2.bf16.msra.mxu0 0
    %143 = vmatprep.subr.bf16.mxu0 0
    %144 = vmatpush2.bf16.msra.mxu0 0
    %145 = vmatprep.mubr.bf16.mxu0 0
    %146 = vmatmul.mubr.bf16.gmra.mxu0 %v111
    %v147 = vpop.f32.mrf.mxu0
    %v148 = vadd.f32 %v78, %v147
    %v149 = vpop.f32.mrf.mxu0
    %v150 = vpop.f32.mrf.mxu0
    %v151 = vadd.f32 %v78, %v150
    %v152 = vpop.f32.mrf.mxu0
    %153 = vdwg.mxu0
    %v154 = vpack.c.bf16 %v151, %v148
    %v155 = vtanh.bf16.pop %v154
    %v156 = vld [vmem:[#allocation7] sm:$0xf]
    %v157 = vld [vmem:[#allocation7 + $0x4] sm:$0xf]
    %v158 = vld [vmem:[#allocation7 + $0x8] sm:$0xf]
    %v159 = vld [vmem:[#allocation7 + $0xc] sm:$0xf]
    %v160 = vld [vmem:[#allocation7 + $0x10] sm:$0xf]
    %v161 = vld [vmem:[#allocation7 + $0x14] sm:$0xf]
    %v162 = vld [vmem:[#allocation7 + $0x18] sm:$0xf]
    %v163 = vld [vmem:[#allocation7 + $0x1c] sm:$0xf]
    %v164 = vld [vmem:[#allocation7 + $0x20] sm:$0xf]
    %v165 = vld [vmem:[#allocation7 + $0x24] sm:$0xf]
    %v166 = vld [vmem:[#allocation7 + $0x28] sm:$0xf]
    %v167 = vld [vmem:[#allocation7 + $0x2c] sm:$0xf]
    %v168 = vld [vmem:[#allocation7 + $0x30] sm:$0xf]
    %v169 = vld [vmem:[#allocation7 + $0x34] sm:$0xf]
    %v170 = vld [vmem:[#allocation7 + $0x38] sm:$0xf]
    %v171 = vld [vmem:[#allocation7 + $0x3c] sm:$0xf]
    %v172 = vld [vmem:[%s4] sm:$0x1]
    %v174 = vlaneseq
    %v175 = vshrl.u32 %v174, 7
    %v176 = vsub.s32 0, %v175
    %v177 = vrot.slane %v172, %v176
    %v195 = vunpack.c.l.b16 %v156
    %v196 = vunpack.c.l.b16 %v157
    %v197 = vunpack.c.l.b16 %v158
    %v198 = vunpack.c.l.b16 %v159
    %v199 = vunpack.c.l.b16 %v160
    %v200 = vunpack.c.l.b16 %v161
    %v201 = vunpack.c.l.b16 %v162
    %v202 = vunpack.c.l.b16 %v163
    %v203 = vunpack.c.l.b16 %v164
    %v204 = vunpack.c.l.b16 %v165
    %v205 = vunpack.c.l.b16 %v166
    %v206 = vunpack.c.l.b16 %v167
    %v207 = vunpack.c.l.b16 %v168
    %v208 = vunpack.c.l.b16 %v169
    %v209 = vunpack.c.l.b16 %v170
    %v210 = vunpack.c.l.b16 %v171
    %v211 = vpack.c.b16 %v196, %v195
    %v212 = vpack.c.b16 %v198, %v197
    %v213 = vpack.c.b16 %v200, %v199
    %v214 = vpack.c.b16 %v202, %v201
    %v215 = vpack.c.b16 %v204, %v203
    %v216 = vpack.c.b16 %v206, %v205
    %v217 = vpack.c.b16 %v208, %v207
    %v218 = vpack.c.b16 %v210, %v209
    %227 = vmatprep.subr.bf16.mxu0 0
    %228 = vmatpush1.bf16.msra.mxu0 %v218
    %229 = vmatprep.subr.bf16.mxu0 0
    %230 = vmatpush1.bf16.msra.mxu0 %v217
    %231 = vmatprep.subr.bf16.mxu0 0
    %232 = vmatpush1.bf16.msra.mxu0 %v216
    %233 = vmatprep.subr.bf16.mxu0 0
    %234 = vmatpush1.bf16.msra.mxu0 %v215
    %235 = vmatprep.subr.bf16.mxu0 0
    %236 = vmatpush1.bf16.msra.mxu0 %v214
    %237 = vmatprep.subr.bf16.mxu0 0
    %238 = vmatpush1.bf16.msra.mxu0 %v213
    %239 = vmatprep.subr.bf16.mxu0 0
    %240 = vmatpush1.bf16.msra.mxu0 %v212
    %241 = vmatprep.subr.bf16.mxu0 0
    %242 = vmatpush1.bf16.msra.mxu0 %v211
    %243 = vmatprep.subr.bf16.mxu0 0
    %244 = vmatpush2.bf16.msra.mxu0 0
    %245 = vmatprep.subr.bf16.mxu0 0
    %246 = vmatpush2.bf16.msra.mxu0 0
    %247 = vmatprep.subr.bf16.mxu0 0
    %248 = vmatpush2.bf16.msra.mxu0 0
    %249 = vmatprep.subr.bf16.mxu0 0
    %250 = vmatpush2.bf16.msra.mxu0 0
    %251 = vmatprep.subr.bf16.mxu0 0
    %252 = vmatpush2.bf16.msra.mxu0 0
    %253 = vmatprep.subr.bf16.mxu0 0
    %254 = vmatpush2.bf16.msra.mxu0 0
    %255 = vmatprep.subr.bf16.mxu0 0
    %256 = vmatpush2.bf16.msra.mxu0 0
    %257 = vmatprep.subr.bf16.mxu0 0
    %258 = vmatpush2.bf16.msra.mxu0 0
    %259 = vmatprep.mubr.bf16.mxu0 0
    %260 = vmatmul.mubr.bf16.gmra.mxu0 %v155
    %v261 = vpop.f32.mrf.mxu0
    %v262 = vadd.f32 %v177, %v261
    %v263 = vpop.f32.mrf.mxu0
    %v264 = vpop.f32.mrf.mxu0
    %v265 = vadd.f32 %v177, %v264
    %v266 = vpop.f32.mrf.mxu0
    %267 = vdwg.mxu0
    %268 = vst [vmem:[#allocation8] sm:$0xff] %v262
    %269 = vst [vmem:[#allocation8 + $0x8] sm:$0xff] %v265
    // Predicated region
    $region34: #{tpu_custom_call.1} parent=1 // pred_check
      _
    $region35: #{tpu_custom_call.1} parent=1 // pred_check_branch
      %271 = sbr.rel (0) target = $region37
    $region36: #{tpu_custom_call.1} parent=1 // pred_region
      %s273 = ssub.s32 256, 256
      %274 = vsyncadd [#allocation4], %s273
      %s275 = sshll.u32 [#allocation8], 4
      %s276 = int_to_ptr.vmem [resolvable:$true] %s275
      %281 = dma.vmem_to_hbm [thread:$0]  %s276, 256, %s5, [#allocation4], 128, 128, 8
    $region37: #{tpu_custom_call.1} parent=1 // pred_fallthru
      _
    // Predicated region
    $region38: #{tpu_custom_call.1} parent=1 // pred_check
      _
    $region39: #{tpu_custom_call.1} parent=1 // pred_check_branch
      %283 = sbr.rel (0) target = $region41
    $region40: #{tpu_custom_call.1} parent=1 // pred_region
      %284 = dma.done [#allocation4], 256
    $region41: #{tpu_custom_call.1} parent=1 // pred_fallthru
      _
    %285 = vsyncpa [#allocation3], 1
    %286 = vsyncpa [#allocation6], 1
    %287 = vsyncpa [#allocation4], 1

</llo_original>
